<compile_context>
chip_gen: v7x
topology: tpu7x:2x2x1
jax: 0.10.0
libtpu: 0.0.40
codegen_flags: <defaults>
</compile_context>

<pallas_src>
import jax
import jax.numpy as jnp
import numpy as np
from jax.experimental import pallas as pl
from jax.experimental.pallas import tpu as pltpu

_LANE = 128     # TPU lane width
_SUBLANE = 8    # TPU sublane count


def _round_up(x, m):
    return ((x + m - 1) // m) * m


def domain_learner_kernel(x_ref, wb_ref, o_ref):
    """x_ref:  (TB, HW, C)  channels-last feature block (f32 or bf16).
       wb_ref: (C + 8, Dp)  packed [W.T / (H*W) ; bias row], f32.
       o_ref:  (TB, Dp)     lane-padded logits, f32."""
    c = wb_ref.shape[0] - _SUBLANE
    # Upcast immediately (bf16 path; v5e VPU has no bf16 ALUs), then spatial sum
    # over the sublane axis -> mostly VPU vreg adds, f32 accumulation.
    pooled = jnp.sum(x_ref[...].astype(jnp.float32), axis=1)          # (TB, C)
    w = wb_ref[:c, :]                                                  # (C, Dp) static view
    b = wb_ref[c:c + 1, :]                                             # (1, Dp)
    y = jnp.dot(pooled, w, preferred_element_type=jnp.float32) + b     # MXU, f32 acc
    o_ref[...] = y.astype(o_ref.dtype)


def prepare_params(w_cls, b_cls, spatial_size):
    """One-time packing: PyTorch (D, C) weight -> (C + 8, Dp) buffer.

    Rows [0:C]   : W.T / (H*W)  (mean scale folded in), zero-padded to Dp lanes.
    Rows [C:C+8] : bias in row 0, zero elsewhere (8 sublanes for alignment).
    """
    w_cls = jnp.asarray(w_cls, jnp.float32)               # (D, C)
    b_cls = jnp.asarray(b_cls, jnp.float32)               # (D,)
    D, C = w_cls.shape
    assert C % _SUBLANE == 0, "channel dim must be sublane-aligned (ResNet: 512 / 2048)"
    Dp = _round_up(D, _LANE)
    w_t = jnp.zeros((C, Dp), jnp.float32).at[:, :D].set(w_cls.T / float(spatial_size))
    b_p = jnp.zeros((_SUBLANE, Dp), jnp.float32).at[0, :D].set(b_cls)
    return jnp.concatenate([w_t, b_p], axis=0), D          # (C + 8, Dp)


def domain_learner_forward(x_nhwc, packed_params, num_domain, block_b=128):
    """x_nhwc: (B, H, W, C) channels-last feature map, float32 or bfloat16.
    packed_params: output of prepare_params (1/(H*W) already folded in)."""
    B, H, W, C = x_nhwc.shape
    HW = H * W
    x3 = x_nhwc.reshape(B, HW, C)                           # contiguous, free reshape
    Dp = packed_params.shape[1]

    # Batch tile: multiple of 8 (output sublane constraint) and >= 2 grid steps
    # when B >= 16 so both v7x TensorCores get work; cap by block_b.
    if B < 2 * _SUBLANE:
        tb = B                                              # single full block
    else:
        tb = min(block_b, _round_up(pl.cdiv(B, 2), _SUBLANE))

    def x_block_bytes(t):                                   # sublane-padded footprint
        return t * _round_up(HW, _SUBLANE) * C * x3.dtype.itemsize

    # Keep double-buffered x well inside VMEM on every generation (v7x: 64 MiB).
    while tb > _SUBLANE and 2 * x_block_bytes(tb) > (48 << 20):
        tb = _round_up(tb // 2, _SUBLANE)
    nb = pl.cdiv(B, tb)

    param_bytes = packed_params.size * packed_params.dtype.itemsize
    out_block_bytes = tb * Dp * 4
    vmem_budget = 2 * x_block_bytes(tb) + 2 * param_bytes + 2 * out_block_bytes
    vmem_limit = int(min(max(vmem_budget + (2 << 20), 16 << 20), 64 << 20))

    cost = pl.CostEstimate(
        flops=B * HW * C + 2 * B * C * Dp,
        transcendentals=0,
        bytes_accessed=x3.size * x3.dtype.itemsize + param_bytes + B * Dp * 4,
    )

    y_pad = pl.pallas_call(
        domain_learner_kernel,
        out_shape=jax.ShapeDtypeStruct((B, Dp), jnp.float32),
        grid=(nb,),
        in_specs=[
            pl.BlockSpec((tb, HW, C), lambda i: (i, 0, 0)),
            # Constant block index -> packed weights stay VMEM-resident across steps.
            pl.BlockSpec(packed_params.shape, lambda i: (0, 0)),
        ],
        out_specs=pl.BlockSpec((tb, Dp), lambda i: (i, 0)),
        compiler_params=pltpu.CompilerParams(
            dimension_semantics=("parallel",),
            vmem_limit_bytes=vmem_limit),
        cost_estimate=cost,
    )(x3, packed_params)

    return y_pad[:, :num_domain]


def reference_forward(x_nchw, w_cls, b_cls):
    """Pure-JAX reference matching the PyTorch forward (NCHW input)."""
    pooled = jnp.mean(x_nchw, axis=(2, 3))                  # AdaptiveAvgPool2d((1,1)) + flatten
    return pooled @ w_cls.T + b_cls


if __name__ == "__main__":
    # resnet_18=True -> 512-channel feature map; ResNet final spatial map is 7x7.
    B, C, H, W, NUM_DOMAIN = 16, 512, 7, 7, 4

    key = jax.random.PRNGKey(0)
    kx, kw, kb = jax.random.split(key, 3)
    x_nchw = jax.random.normal(kx, (B, C, H, W), jnp.float32)

    # nn.Linear default init (uniform +-1/sqrt(fan_in)), PyTorch (out, in) layout.
    lim = 1.0 / np.sqrt(C)
    w_cls = jax.random.uniform(kw, (NUM_DOMAIN, C), jnp.float32, -lim, lim)
    b_cls = jax.random.uniform(kb, (NUM_DOMAIN,), jnp.float32, -lim, lim)

    # Channels-last view for the lane-dense kernel.  In deployment the upstream
    # conv stack emits NHWC directly; this one-off transpose is demo-only prep.
    x_nhwc = jnp.transpose(x_nchw, (0, 2, 3, 1))

    packed, _ = prepare_params(w_cls, b_cls, H * W)         # one-time, hoisted out of call path
    y_ref = reference_forward(x_nchw, w_cls, b_cls)

    # Exact f32 activation path.
    y = domain_learner_forward(x_nhwc, packed, NUM_DOMAIN)
    y = jax.block_until_ready(y)
    np.testing.assert_allclose(np.asarray(y), np.asarray(y_ref), rtol=1e-4, atol=1e-4)

    # Halved-HBM bf16 activation path (f32 accumulation inside the kernel).
    y_bf16 = domain_learner_forward(x_nhwc.astype(jnp.bfloat16), packed, NUM_DOMAIN)
    y_bf16 = jax.block_until_ready(y_bf16)
    np.testing.assert_allclose(np.asarray(y_bf16), np.asarray(y_ref), rtol=5e-2, atol=1e-2)

    print("KERNEL_OK")
</pallas_src>

<mosaic_0001>
module attributes {stable_mosaic.version = 11 : i64} {
  func.func @domain_learner_kernel(%arg0: i32, %arg1: memref<8x49x512xf32, #tpu.memory_space<vmem>>, %arg2: memref<520x128xf32, #tpu.memory_space<vmem>>, %arg3: memref<8x128xf32, #tpu.memory_space<vmem>>) attributes {dimension_semantics = [#tpu.dimension_semantics<parallel>], iteration_bounds = array<i64: 2>, scalar_prefetch = 0 : i64, scratch_operands = 0 : i64, tpu.core_type = #tpu.core_type<tc>, window_params = [{transform_indices = @transform_0, window_bounds = array<i64: 8, 49, 512>}, {pipeline_mode = #tpu.pipeline_mode<synchronous>, transform_indices = @transform_1, window_bounds = array<i64: 520, 128>}, {transform_indices = @transform_2, window_bounds = array<i64: 8, 128>}]} {
    %c0 = arith.constant 0 : index
    %c0_0 = arith.constant 0 : index
    %c0_1 = arith.constant 0 : index
    %0 = vector.load %arg1[%c0, %c0_0, %c0_1] : memref<8x49x512xf32, #tpu.memory_space<vmem>>, vector<8x49x512xf32>
    %cst = arith.constant dense<0.000000e+00> : vector<8x512xf32>
    %1 = vector.multi_reduction <add>, %0, %cst [1] : vector<8x49x512xf32> to vector<8x512xf32>
    %c0_2 = arith.constant 0 : index
    %c0_3 = arith.constant 0 : index
    %2 = vector.load %arg2[%c0_2, %c0_3] : memref<520x128xf32, #tpu.memory_space<vmem>>, vector<512x128xf32>
    %c512 = arith.constant 512 : index
    %c0_4 = arith.constant 0 : index
    %3 = vector.load %arg2[%c512, %c0_4] : memref<520x128xf32, #tpu.memory_space<vmem>>, vector<1x128xf32>
    %cst_5 = arith.constant dense<0.000000e+00> : vector<8x128xf32>
    %4 = tpu.matmul %1, %2, %cst_5 {dimension_numbers = #tpu.dot_dimension_numbers<[1], [0], [0], [1], [0, 0, 1, 1], [], []>} : vector<8x512xf32>, vector<512x128xf32>, vector<8x128xf32> -> vector<8x128xf32>
    %5 = vector.broadcast %3 : vector<1x128xf32> to vector<8x128xf32>
    %6 = arith.addf %4, %5 : vector<8x128xf32>
    %c0_6 = arith.constant 0 : index
    %c0_7 = arith.constant 0 : index
    %7 = vector.load %arg3[%c0_6, %c0_7] : memref<8x128xf32, #tpu.memory_space<vmem>>, vector<8x128xf32>
    tpu.vector_store %arg3[%c0_6, %c0_7], %6 {strides = array<i32>} : memref<8x128xf32, #tpu.memory_space<vmem>>, vector<8x128xf32>,
    return
  }
  func.func @transform_0(%arg0: i32) -> (i32, i32, i32) {
    %c0_i32 = arith.constant 0 : i32
    %c0_i32_0 = arith.constant 0 : i32
    %c0_i32_1 = arith.constant 0 : i32
    return %arg0, %c0_i32, %c0_i32_0 : i32, i32, i32
  }
  func.func @transform_1(%arg0: i32) -> (i32, i32) {
    %c0_i32 = arith.constant 0 : i32
    %c0_i32_0 = arith.constant 0 : i32
    %c0_i32_1 = arith.constant 0 : i32
    return %c0_i32, %c0_i32_0 : i32, i32
  }
  func.func @transform_2(%arg0: i32) -> (i32, i32) {
    %c0_i32 = arith.constant 0 : i32
    %c0_i32_0 = arith.constant 0 : i32
    return %arg0, %c0_i32 : i32, i32
  }
}

</mosaic_0001>

<llo_original>
// kernel: tpu_custom_call.1
$region0: #{tpu_custom_call.1}
  #allocation0 [shape = 'u32[]', space=smem, size = 0x4, offset = 0x4, fixed_abs, tag = 'smem constant byte address 0x4 - core index']
  #allocation1 [shape = 'u32[144,128]{1,0:T(1,128)}', space=vmem, size = 0x12000, scoped, tag = 'internal scratch']
  %s0 = inlined_call_operand.vmem [shape: f32[16,49,512], index: 0, kind: input, shape index: {}]
  %s1 = inlined_call_operand.vmem [shape: f32[520,128], index: 1, kind: input, shape index: {}]
  %s2 = inlined_call_operand.hbm [shape: f32[16,128], index: 2, kind: output, shape index: {}]
  %s3 = sld [smem:[#allocation0]]
  $region41: #{tpu_custom_call.1} parent=0
    _
  %s5 = ssub.s32 1, %s3
  %s6 = scalar_select 0, %s5, %s3
  $region1: #{tpu_custom_call.1} parent=0
    #allocation2 [shape = 'u8[8192]{0}', space=vmem, size = 0x2000, scoped, tag = 'output window, operand 0']
    #allocation3 [shape = 's32[2]{0}', space=sflag, size = 0x8, scoped, tag = 'scoped memory for tpu_custom_call.1']
    %7 = vsyncpa [#allocation3], 0
    %s8 = scalar_lea.sflag [#allocation3], 1
    %9 = vsyncpa %s8, 0
    loop: start=0, step=1, limit=4
    $region2: #{tpu_custom_call.1} parent=1 // loop_pre_header
      _
    $region3: #{tpu_custom_call.1} parent=1 // loop_header
      %s11 = sphi 0, %s15
      %p12 = scmp.ge.s32.totalorder %s11, 4
      %s21 = sphi 0, %s23
      %s24 = sphi 0, %s21
      %s25 = sphi 0, %s24
      %s41 = sphi 0, %s25
      %s45 = sphi 0, %s45
      %s47 = sphi 0, %s45
      %s48 = sphi 0, %s47
      %s62 = sphi 0, %s48
      %s68 = sphi 0, %s70
      %s71 = sphi 0, %s68
      %s72 = sphi 0, %s71
      %s88 = sphi 0, %s72
    $region4: #{tpu_custom_call.1} parent=1 // loop_header_branch
      %14 = sbr.rel (%p12) target = $region8
    $region5: #{tpu_custom_call.1} parent=1 // loop_body
      %s16 = ssub.s32 %s11, 1
      %s17 = ssub.s32 %s11, 2
      %s18 = sadd.s32 %s11, 1
      %s19 = ssub.s32 %s11, %s18
      %p20 = scmp.eq.s32.totalorder %s19, 0
      %s22 = sadd.s32 %s21, 1
      %s23 = scalar_select %p20, %s21, %s22
      %p26 = pneg %p20
      %p27 = scmp.eq.s32.totalorder %s11, 1
      %p28 = por %p26, %p27
      %p29 = scmp.ne.s32.totalorder %s21, %s24
      %p30 = scmp.eq.s32.totalorder %s11, 0
      %p31 = por %p29, %p30
      %p32 = scmp.ne.s32.totalorder %s21, %s24
      %p33 = scmp.eq.s32.totalorder %s16, 1
      %p34 = por %p32, %p33
      %p35 = scmp.ne.s32.totalorder %s24, %s25
      %p36 = scmp.eq.s32.totalorder %s16, 0
      %p37 = por %p35, %p36
      %p38 = scmp.ne.s32.totalorder %s24, %s25
      %p39 = scmp.eq.s32.totalorder %s17, 1
      %p40 = por %p38, %p39
      %p42 = scmp.ne.s32.totalorder %s25, %s41
      %p43 = scmp.eq.s32.totalorder %s17, 0
      %p44 = por %p42, %p43
      %s46 = sadd.s32 %s45, 1
      %p49 = scmp.eq.s32.totalorder %s11, 1
      %p50 = scmp.ne.s32.totalorder %s45, %s47
      %p51 = scmp.eq.s32.totalorder %s11, 0
      %p52 = por %p50, %p51
      %p53 = scmp.ne.s32.totalorder %s45, %s47
      %p54 = scmp.eq.s32.totalorder %s16, 1
      %p55 = por %p53, %p54
      %p56 = scmp.ne.s32.totalorder %s47, %s48
      %p57 = scmp.eq.s32.totalorder %s16, 0
      %p58 = por %p56, %p57
      %p59 = scmp.ne.s32.totalorder %s47, %s48
      %p60 = scmp.eq.s32.totalorder %s17, 1
      %p61 = por %p59, %p60
      %p63 = scmp.ne.s32.totalorder %s48, %s62
      %p64 = scmp.eq.s32.totalorder %s17, 0
      %p65 = por %p63, %p64
      %s66 = ssub.s32 %s11, %s18
      %p67 = scmp.eq.s32.totalorder %s66, 0
      %s69 = sadd.s32 %s68, 1
      %s70 = scalar_select %p67, %s68, %s69
      %p73 = pneg %p67
      %p74 = scmp.eq.s32.totalorder %s11, 1
      %p75 = por %p73, %p74
      %p76 = scmp.ne.s32.totalorder %s68, %s71
      %p77 = scmp.eq.s32.totalorder %s11, 0
      %p78 = por %p76, %p77
      %p79 = scmp.ne.s32.totalorder %s68, %s71
      %p80 = scmp.eq.s32.totalorder %s16, 1
      %p81 = por %p79, %p80
      %p82 = scmp.ne.s32.totalorder %s71, %s72
      %p83 = scmp.eq.s32.totalorder %s16, 0
      %p84 = por %p82, %p83
      %p85 = scmp.ne.s32.totalorder %s71, %s72
      %p86 = scmp.eq.s32.totalorder %s17, 1
      %p87 = por %p85, %p86
      %p89 = scmp.ne.s32.totalorder %s72, %s88
      %p90 = scmp.eq.s32.totalorder %s17, 0
      %p91 = por %p89, %p90
      %p92 = scmp.le.s32.totalorder 1, %s11
      %p93 = scmp.lt.s32.totalorder %s11, 3
      %p94 = pnand %p92, %p93
      %p95 = pneg %p94
      // Predicated region
      $region9: #{tpu_custom_call.1} parent=5 // pred_check
        _
      $region10: #{tpu_custom_call.1} parent=5 // pred_check_branch
        %97 = sbr.rel (%p94) target = $region12
      $region11: #{tpu_custom_call.1} parent=5 // pred_region
        %s98 = ssub.s32 %s11, 1
        // Predicated region
        $region13: #{tpu_custom_call.1} parent=11 // pred_check
          %p99 = pneg %p58
        $region14: #{tpu_custom_call.1} parent=11 // pred_check_branch
          %101 = sbr.rel (%p99) target = $region16
        $region15: #{tpu_custom_call.1} parent=11 // pred_region
          _
        $region16: #{tpu_custom_call.1} parent=11 // pred_fallthru
          _
      $region12: #{tpu_custom_call.1} parent=5 // pred_fallthru
        _
      %p102 = scmp.lt.s32.totalorder %s11, 2
      // Predicated region
      $region17: #{tpu_custom_call.1} parent=5 // pred_check
        %p103 = pneg %p102
      $region18: #{tpu_custom_call.1} parent=5 // pred_check_branch
        %105 = sbr.rel (%p103) target = $region20
      $region19: #{tpu_custom_call.1} parent=5 // pred_region
        // Predicated region
        $region21: #{tpu_custom_call.1} parent=19 // pred_check
          %p106 = pneg %p31
        $region22: #{tpu_custom_call.1} parent=19 // pred_check_branch
          %108 = sbr.rel (%p106) target = $region24
        $region23: #{tpu_custom_call.1} parent=19 // pred_region
          %s109 = smul.u32 8, %s11
          %p110 = scmp.lt.s32.totalorder %s109, 15
          %s111 = scalar_select %p110, %s109, 15
          %s112 = smul.addr %s111, 28
          %s113 = smul.addr %s112, 8
          %s114 = scalar_lea.vmem %s0, %s113
          %s115 = smul.u32 8, %s11
        $region24: #{tpu_custom_call.1} parent=19 // pred_fallthru
          _
      $region20: #{tpu_custom_call.1} parent=5 // pred_fallthru
        _
      %p116 = scmp.le.s32.totalorder 1, %s11
      %p117 = scmp.lt.s32.totalorder %s11, 3
      %p118 = pnand %p116, %p117
      %p119 = pneg %p118
      // Predicated region
      $region25: #{tpu_custom_call.1} parent=5 // pred_check
        _
      $region26: #{tpu_custom_call.1} parent=5 // pred_check_branch
        %121 = sbr.rel (%p118) target = $region28
      $region27: #{tpu_custom_call.1} parent=5 // pred_region
        %s122 = ssub.s32 %s11, 1
        %s123 = smul.u32 8, %s16
        %p124 = scmp.lt.s32.totalorder %s123, 15
        %s125 = scalar_select %p124, %s123, 15
        %s126 = smul.addr %s125, 28
        %s127 = smul.addr %s126, 8
        %s128 = scalar_lea.vmem %s0, %s127
        %p129 = pneg %p37
        %p130 = pneg %p34
        %p131 = pneg %p58
        %p132 = pneg %p55
        %p133 = pneg %p84
        %p134 = pneg %p81
        %s135 = sand.u32 %s71, 1
        %s136 = scalar_lea.sflag [#allocation3], %s135
        %s137 = sand.u32 %s71, 1
        %s138 = smul.addr %s137, 8
        %s139 = scalar_lea.vmem [#allocation2], %s138
        %s140 = smul.u32 8, %s16
        %p141 = scmp.lt.s32.totalorder %s140, 15
        %s142 = scalar_select %p141, %s140, 15
        %s143 = smul.addr %s142, 28
        %s144 = smul.addr %s143, 8
        %s145 = scalar_lea.vmem %s0, %s144
        %s146 = smul.u32 8, %s16
        %v147 = vld [vmem:[%s145] sm:$0xff]
        %v148 = vld [vmem:[%s145 + $0x8] sm:$0xff]
        %v149 = vld [vmem:[%s145 + $0x10] sm:$0xff]
        %v150 = vld [vmem:[%s145 + $0x18] sm:$0xff]
        %v151 = vld [vmem:[%s145 + $0x20] sm:$0xff]
        %v152 = vld [vmem:[%s145 + $0x28] sm:$0xff]
        %v153 = vld [vmem:[%s145 + $0x30] sm:$0xff]
        %v154 = vld [vmem:[%s145 + $0x38] sm:$0xff]
        %v155 = vld [vmem:[%s145 + $0x40] sm:$0xff]
        %v156 = vld [vmem:[%s145 + $0x48] sm:$0xff]
        %v157 = vld [vmem:[%s145 + $0x50] sm:$0xff]
        %v158 = vld [vmem:[%s145 + $0x58] sm:$0xff]
        %v159 = vld [vmem:[%s145 + $0x60] sm:$0xff]
        %v160 = vld [vmem:[%s145 + $0x68] sm:$0xff]
        %v161 = vld [vmem:[%s145 + $0x70] sm:$0xff]
        %v162 = vld [vmem:[%s145 + $0x78] sm:$0xff]
        %v163 = vld [vmem:[%s145 + $0x80] sm:$0xff]
        %v164 = vld [vmem:[%s145 + $0x88] sm:$0xff]
        %v165 = vld [vmem:[%s145 + $0x90] sm:$0xff]
        %v166 = vld [vmem:[%s145 + $0x98] sm:$0xff]
        %v167 = vld [vmem:[%s145 + $0xa0] sm:$0xff]
        %v168 = vld [vmem:[%s145 + $0xa8] sm:$0xff]
        %v169 = vld [vmem:[%s145 + $0xb0] sm:$0xff]
        %v170 = vld [vmem:[%s145 + $0xb8] sm:$0xff]
        %v171 = vld [vmem:[%s145 + $0xc0] sm:$0x1]
        %v172 = vld [vmem:[%s145 + $0xc8] sm:$0x1]
        %v173 = vld [vmem:[%s145 + $0xd0] sm:$0x1]
        %v174 = vld [vmem:[%s145 + $0xd8] sm:$0x1]
        %v175 = vld [vmem:[%s145 + $0xe0] sm:$0xff]
        %v176 = vld [vmem:[%s145 + $0xe8] sm:$0xff]
        %v177 = vld [vmem:[%s145 + $0xf0] sm:$0xff]
        %v178 = vld [vmem:[%s145 + $0xf8] sm:$0xff]
        %v179 = vld [vmem:[%s145 + $0x100] sm:$0xff]
        %v180 = vld [vmem:[%s145 + $0x108] sm:$0xff]
        %v181 = vld [vmem:[%s145 + $0x110] sm:$0xff]
        %v182 = vld [vmem:[%s145 + $0x118] sm:$0xff]
        %v183 = vld [vmem:[%s145 + $0x120] sm:$0xff]
        %v184 = vld [vmem:[%s145 + $0x128] sm:$0xff]
        %v185 = vld [vmem:[%s145 + $0x130] sm:$0xff]
        %v186 = vld [vmem:[%s145 + $0x138] sm:$0xff]
        %v187 = vld [vmem:[%s145 + $0x140] sm:$0xff]
        %v188 = vld [vmem:[%s145 + $0x148] sm:$0xff]
        %v189 = vld [vmem:[%s145 + $0x150] sm:$0xff]
        %v190 = vld [vmem:[%s145 + $0x158] sm:$0xff]
        %v191 = vld [vmem:[%s145 + $0x160] sm:$0xff]
        %v192 = vld [vmem:[%s145 + $0x168] sm:$0xff]
        %v193 = vld [vmem:[%s145 + $0x170] sm:$0xff]
        %v194 = vld [vmem:[%s145 + $0x178] sm:$0xff]
        %v195 = vld [vmem:[%s145 + $0x180] sm:$0xff]
        %v196 = vld [vmem:[%s145 + $0x188] sm:$0xff]
        %v197 = vld [vmem:[%s145 + $0x190] sm:$0xff]
        %v198 = vld [vmem:[%s145 + $0x198] sm:$0xff]
        %v199 = vld [vmem:[%s145 + $0x1a0] sm:$0x1]
        %v200 = vld [vmem:[%s145 + $0x1a8] sm:$0x1]
        %v201 = vld [vmem:[%s145 + $0x1b0] sm:$0x1]
        %v202 = vld [vmem:[%s145 + $0x1b8] sm:$0x1]
        %v203 = vld [vmem:[%s145 + $0x1c0] sm:$0xff]
        %v204 = vld [vmem:[%s145 + $0x1c8] sm:$0xff]
        %v205 = vld [vmem:[%s145 + $0x1d0] sm:$0xff]
        %v206 = vld [vmem:[%s145 + $0x1d8] sm:$0xff]
        %v207 = vld [vmem:[%s145 + $0x1e0] sm:$0xff]
        %v208 = vld [vmem:[%s145 + $0x1e8] sm:$0xff]
        %v209 = vld [vmem:[%s145 + $0x1f0] sm:$0xff]
        %v210 = vld [vmem:[%s145 + $0x1f8] sm:$0xff]
        %v211 = vld [vmem:[%s145 + $0x200] sm:$0xff]
        %v212 = vld [vmem:[%s145 + $0x208] sm:$0xff]
        %v213 = vld [vmem:[%s145 + $0x210] sm:$0xff]
        %v214 = vld [vmem:[%s145 + $0x218] sm:$0xff]
        %v215 = vld [vmem:[%s145 + $0x220] sm:$0xff]
        %v216 = vld [vmem:[%s145 + $0x228] sm:$0xff]
        %v217 = vld [vmem:[%s145 + $0x230] sm:$0xff]
        %v218 = vld [vmem:[%s145 + $0x238] sm:$0xff]
        %v219 = vld [vmem:[%s145 + $0x240] sm:$0xff]
        %v220 = vld [vmem:[%s145 + $0x248] sm:$0xff]
        %v221 = vld [vmem:[%s145 + $0x250] sm:$0xff]
        %v222 = vld [vmem:[%s145 + $0x258] sm:$0xff]
        %v223 = vld [vmem:[%s145 + $0x260] sm:$0xff]
        %v224 = vld [vmem:[%s145 + $0x268] sm:$0xff]
        %v225 = vld [vmem:[%s145 + $0x270] sm:$0xff]
        %v226 = vld [vmem:[%s145 + $0x278] sm:$0xff]
        %v227 = vld [vmem:[%s145 + $0x280] sm:$0x1]
        %v228 = vld [vmem:[%s145 + $0x288] sm:$0x1]
        %v229 = vld [vmem:[%s145 + $0x290] sm:$0x1]
        %v230 = vld [vmem:[%s145 + $0x298] sm:$0x1]
        %v231 = vld [vmem:[%s145 + $0x2a0] sm:$0xff]
        %v232 = vld [vmem:[%s145 + $0x2a8] sm:$0xff]
        %v233 = vld [vmem:[%s145 + $0x2b0] sm:$0xff]
        %v234 = vld [vmem:[%s145 + $0x2b8] sm:$0xff]
        %v235 = vld [vmem:[%s145 + $0x2c0] sm:$0xff]
        %v236 = vld [vmem:[%s145 + $0x2c8] sm:$0xff]
        %v237 = vld [vmem:[%s145 + $0x2d0] sm:$0xff]
        %v238 = vld [vmem:[%s145 + $0x2d8] sm:$0xff]
        %v239 = vld [vmem:[%s145 + $0x2e0] sm:$0xff]
        %v240 = vld [vmem:[%s145 + $0x2e8] sm:$0xff]
        %v241 = vld [vmem:[%s145 + $0x2f0] sm:$0xff]
        %v242 = vld [vmem:[%s145 + $0x2f8] sm:$0xff]
        %v243 = vld [vmem:[%s145 + $0x300] sm:$0xff]
        %v244 = vld [vmem:[%s145 + $0x308] sm:$0xff]
        %v245 = vld [vmem:[%s145 + $0x310] sm:$0xff]
        %v246 = vld [vmem:[%s145 + $0x318] sm:$0xff]
        %v247 = vld [vmem:[%s145 + $0x320] sm:$0xff]
        %v248 = vld [vmem:[%s145 + $0x328] sm:$0xff]
        %v249 = vld [vmem:[%s145 + $0x330] sm:$0xff]
        %v250 = vld [vmem:[%s145 + $0x338] sm:$0xff]
        %v251 = vld [vmem:[%s145 + $0x340] sm:$0xff]
        %v252 = vld [vmem:[%s145 + $0x348] sm:$0xff]
        %v253 = vld [vmem:[%s145 + $0x350] sm:$0xff]
        %v254 = vld [vmem:[%s145 + $0x358] sm:$0xff]
        %v255 = vld [vmem:[%s145 + $0x360] sm:$0x1]
        %v256 = vld [vmem:[%s145 + $0x368] sm:$0x1]
        %v257 = vld [vmem:[%s145 + $0x370] sm:$0x1]
        %v258 = vld [vmem:[%s145 + $0x378] sm:$0x1]
        %v259 = vld [vmem:[%s145 + $0x380] sm:$0xff]
        %v260 = vld [vmem:[%s145 + $0x388] sm:$0xff]
        %v261 = vld [vmem:[%s145 + $0x390] sm:$0xff]
        %v262 = vld [vmem:[%s145 + $0x398] sm:$0xff]
        %v263 = vld [vmem:[%s145 + $0x3a0] sm:$0xff]
        %v264 = vld [vmem:[%s145 + $0x3a8] sm:$0xff]
        %v265 = vld [vmem:[%s145 + $0x3b0] sm:$0xff]
        %v266 = vld [vmem:[%s145 + $0x3b8] sm:$0xff]
        %v267 = vld [vmem:[%s145 + $0x3c0] sm:$0xff]
        %v268 = vld [vmem:[%s145 + $0x3c8] sm:$0xff]
        %v269 = vld [vmem:[%s145 + $0x3d0] sm:$0xff]
        %v270 = vld [vmem:[%s145 + $0x3d8] sm:$0xff]
        %v271 = vld [vmem:[%s145 + $0x3e0] sm:$0xff]
        %v272 = vld [vmem:[%s145 + $0x3e8] sm:$0xff]
        %v273 = vld [vmem:[%s145 + $0x3f0] sm:$0xff]
        %v274 = vld [vmem:[%s145 + $0x3f8] sm:$0xff]
        %v275 = vld [vmem:[%s145 + $0x400] sm:$0xff]
        %v276 = vld [vmem:[%s145 + $0x408] sm:$0xff]
        %v277 = vld [vmem:[%s145 + $0x410] sm:$0xff]
        %v278 = vld [vmem:[%s145 + $0x418] sm:$0xff]
        %v279 = vld [vmem:[%s145 + $0x420] sm:$0xff]
        %v280 = vld [vmem:[%s145 + $0x428] sm:$0xff]
        %v281 = vld [vmem:[%s145 + $0x430] sm:$0xff]
        %v282 = vld [vmem:[%s145 + $0x438] sm:$0xff]
        %v283 = vld [vmem:[%s145 + $0x440] sm:$0x1]
        %v284 = vld [vmem:[%s145 + $0x448] sm:$0x1]
        %v285 = vld [vmem:[%s145 + $0x450] sm:$0x1]
        %v286 = vld [vmem:[%s145 + $0x458] sm:$0x1]
        %v287 = vld [vmem:[%s145 + $0x460] sm:$0xff]
        %v288 = vld [vmem:[%s145 + $0x468] sm:$0xff]
        %v289 = vld [vmem:[%s145 + $0x470] sm:$0xff]
        %v290 = vld [vmem:[%s145 + $0x478] sm:$0xff]
        %v291 = vld [vmem:[%s145 + $0x480] sm:$0xff]
        %v292 = vld [vmem:[%s145 + $0x488] sm:$0xff]
        %v293 = vld [vmem:[%s145 + $0x490] sm:$0xff]
        %v294 = vld [vmem:[%s145 + $0x498] sm:$0xff]
        %v295 = vld [vmem:[%s145 + $0x4a0] sm:$0xff]
        %v296 = vld [vmem:[%s145 + $0x4a8] sm:$0xff]
        %v297 = vld [vmem:[%s145 + $0x4b0] sm:$0xff]
        %v298 = vld [vmem:[%s145 + $0x4b8] sm:$0xff]
        %v299 = vld [vmem:[%s145 + $0x4c0] sm:$0xff]
        %v300 = vld [vmem:[%s145 + $0x4c8] sm:$0xff]
        %v301 = vld [vmem:[%s145 + $0x4d0] sm:$0xff]
        %v302 = vld [vmem:[%s145 + $0x4d8] sm:$0xff]
        %v303 = vld [vmem:[%s145 + $0x4e0] sm:$0xff]
        %v304 = vld [vmem:[%s145 + $0x4e8] sm:$0xff]
        %v305 = vld [vmem:[%s145 + $0x4f0] sm:$0xff]
        %v306 = vld [vmem:[%s145 + $0x4f8] sm:$0xff]
        %v307 = vld [vmem:[%s145 + $0x500] sm:$0xff]
        %v308 = vld [vmem:[%s145 + $0x508] sm:$0xff]
        %v309 = vld [vmem:[%s145 + $0x510] sm:$0xff]
        %v310 = vld [vmem:[%s145 + $0x518] sm:$0xff]
        %v311 = vld [vmem:[%s145 + $0x520] sm:$0x1]
        %v312 = vld [vmem:[%s145 + $0x528] sm:$0x1]
        %v313 = vld [vmem:[%s145 + $0x530] sm:$0x1]
        %v314 = vld [vmem:[%s145 + $0x538] sm:$0x1]
        %v315 = vld [vmem:[%s145 + $0x540] sm:$0xff]
        %v316 = vld [vmem:[%s145 + $0x548] sm:$0xff]
        %v317 = vld [vmem:[%s145 + $0x550] sm:$0xff]
        %v318 = vld [vmem:[%s145 + $0x558] sm:$0xff]
        %v319 = vld [vmem:[%s145 + $0x560] sm:$0xff]
        %v320 = vld [vmem:[%s145 + $0x568] sm:$0xff]
        %v321 = vld [vmem:[%s145 + $0x570] sm:$0xff]
        %v322 = vld [vmem:[%s145 + $0x578] sm:$0xff]
        %v323 = vld [vmem:[%s145 + $0x580] sm:$0xff]
        %v324 = vld [vmem:[%s145 + $0x588] sm:$0xff]
        %v325 = vld [vmem:[%s145 + $0x590] sm:$0xff]
        %v326 = vld [vmem:[%s145 + $0x598] sm:$0xff]
        %v327 = vld [vmem:[%s145 + $0x5a0] sm:$0xff]
        %v328 = vld [vmem:[%s145 + $0x5a8] sm:$0xff]
        %v329 = vld [vmem:[%s145 + $0x5b0] sm:$0xff]
        %v330 = vld [vmem:[%s145 + $0x5b8] sm:$0xff]
        %v331 = vld [vmem:[%s145 + $0x5c0] sm:$0xff]
        %v332 = vld [vmem:[%s145 + $0x5c8] sm:$0xff]
        %v333 = vld [vmem:[%s145 + $0x5d0] sm:$0xff]
        %v334 = vld [vmem:[%s145 + $0x5d8] sm:$0xff]
        %v335 = vld [vmem:[%s145 + $0x5e0] sm:$0xff]
        %v336 = vld [vmem:[%s145 + $0x5e8] sm:$0xff]
        %v337 = vld [vmem:[%s145 + $0x5f0] sm:$0xff]
        %v338 = vld [vmem:[%s145 + $0x5f8] sm:$0xff]
        %v339 = vld [vmem:[%s145 + $0x600] sm:$0x1]
        %v340 = vld [vmem:[%s145 + $0x608] sm:$0x1]
        %v341 = vld [vmem:[%s145 + $0x610] sm:$0x1]
        %v342 = vld [vmem:[%s145 + $0x618] sm:$0x1]
        %v343 = vld [vmem:[%s145 + $0x620] sm:$0xff]
        %v344 = vld [vmem:[%s145 + $0x628] sm:$0xff]
        %v345 = vld [vmem:[%s145 + $0x630] sm:$0xff]
        %v346 = vld [vmem:[%s145 + $0x638] sm:$0xff]
        %v347 = vld [vmem:[%s145 + $0x640] sm:$0xff]
        %v348 = vld [vmem:[%s145 + $0x648] sm:$0xff]
        %v349 = vld [vmem:[%s145 + $0x650] sm:$0xff]
        %v350 = vld [vmem:[%s145 + $0x658] sm:$0xff]
        %v351 = vld [vmem:[%s145 + $0x660] sm:$0xff]
        %v352 = vld [vmem:[%s145 + $0x668] sm:$0xff]
        %v353 = vld [vmem:[%s145 + $0x670] sm:$0xff]
        %v354 = vld [vmem:[%s145 + $0x678] sm:$0xff]
        %v355 = vld [vmem:[%s145 + $0x680] sm:$0xff]
        %v356 = vld [vmem:[%s145 + $0x688] sm:$0xff]
        %v357 = vld [vmem:[%s145 + $0x690] sm:$0xff]
        %v358 = vld [vmem:[%s145 + $0x698] sm:$0xff]
        %v359 = vld [vmem:[%s145 + $0x6a0] sm:$0xff]
        %v360 = vld [vmem:[%s145 + $0x6a8] sm:$0xff]
        %v361 = vld [vmem:[%s145 + $0x6b0] sm:$0xff]
        %v362 = vld [vmem:[%s145 + $0x6b8] sm:$0xff]
        %v363 = vld [vmem:[%s145 + $0x6c0] sm:$0xff]
        %v364 = vld [vmem:[%s145 + $0x6c8] sm:$0xff]
        %v365 = vld [vmem:[%s145 + $0x6d0] sm:$0xff]
        %v366 = vld [vmem:[%s145 + $0x6d8] sm:$0xff]
        %v367 = vld [vmem:[%s145 + $0x6e0] sm:$0x1]
        %v368 = vld [vmem:[%s145 + $0x6e8] sm:$0x1]
        %v369 = vld [vmem:[%s145 + $0x6f0] sm:$0x1]
        %v370 = vld [vmem:[%s145 + $0x6f8] sm:$0x1]
        %v371 = vadd.f32 %v147, %v151
        %v372 = vadd.f32 %v371, %v155
        %v373 = vadd.f32 %v372, %v159
        %v374 = vadd.f32 %v373, %v163
        %v375 = vadd.f32 %v374, %v167
        %vm376 = vcmask 1040384
        %v377 = vsel %vm376, %v171, 0.0
        %v378 = vadd.f32 %v375, %v377
        %v379 = vrot.slane %v378, 4
        %v380 = vadd.f32 %v378, %v379
        %v381 = vrot.slane %v380, 2
        %v382 = vadd.f32 %v380, %v381
        %v383 = vrot.slane %v382, 1
        %v384 = vadd.f32 %v382, %v383
        %v385 = vadd.f32 %v148, %v152
        %v386 = vadd.f32 %v385, %v156
        %v387 = vadd.f32 %v386, %v160
        %v388 = vadd.f32 %v387, %v164
        %v389 = vadd.f32 %v388, %v168
        %v390 = vsel %vm376, %v172, 0.0
        %v391 = vadd.f32 %v389, %v390
        %v392 = vrot.slane %v391, 4
        %v393 = vadd.f32 %v391, %v392
        %v394 = vrot.slane %v393, 2
        %v395 = vadd.f32 %v393, %v394
        %v396 = vrot.slane %v395, 1
        %v397 = vadd.f32 %v395, %v396
        %v398 = vadd.f32 %v149, %v153
        %v399 = vadd.f32 %v398, %v157
        %v400 = vadd.f32 %v399, %v161
        %v401 = vadd.f32 %v400, %v165
        %v402 = vadd.f32 %v401, %v169
        %v403 = vsel %vm376, %v173, 0.0
        %v404 = vadd.f32 %v402, %v403
        %v405 = vrot.slane %v404, 4
        %v406 = vadd.f32 %v404, %v405
        %v407 = vrot.slane %v406, 2
        %v408 = vadd.f32 %v406, %v407
        %v409 = vrot.slane %v408, 1
        %v410 = vadd.f32 %v408, %v409
        %v411 = vadd.f32 %v150, %v154
        %v412 = vadd.f32 %v411, %v158
        %v413 = vadd.f32 %v412, %v162
        %v414 = vadd.f32 %v413, %v166
        %v415 = vadd.f32 %v414, %v170
        %v416 = vsel %vm376, %v174, 0.0
        %v417 = vadd.f32 %v415, %v416
        %v418 = vrot.slane %v417, 4
        %v419 = vadd.f32 %v417, %v418
        %v420 = vrot.slane %v419, 2
        %v421 = vadd.f32 %v419, %v420
        %v422 = vrot.slane %v421, 1
        %v423 = vadd.f32 %v421, %v422
        %v424 = vadd.f32 %v175, %v179
        %v425 = vadd.f32 %v424, %v183
        %v426 = vadd.f32 %v425, %v187
        %v427 = vadd.f32 %v426, %v191
        %v428 = vadd.f32 %v427, %v195
        %v429 = vsel %vm376, %v199, 0.0
        %v430 = vadd.f32 %v428, %v429
        %v431 = vrot.slane %v430, 4
        %v432 = vadd.f32 %v430, %v431
        %v433 = vrot.slane %v432, 2
        %v434 = vadd.f32 %v432, %v433
        %v435 = vrot.slane %v434, 1
        %v436 = vadd.f32 %v434, %v435
        %v437 = vadd.f32 %v176, %v180
        %v438 = vadd.f32 %v437, %v184
        %v439 = vadd.f32 %v438, %v188
        %v440 = vadd.f32 %v439, %v192
        %v441 = vadd.f32 %v440, %v196
        %v442 = vsel %vm376, %v200, 0.0
        %v443 = vadd.f32 %v441, %v442
        %v444 = vrot.slane %v443, 4
        %v445 = vadd.f32 %v443, %v444
        %v446 = vrot.slane %v445, 2
        %v447 = vadd.f32 %v445, %v446
        %v448 = vrot.slane %v447, 1
        %v449 = vadd.f32 %v447, %v448
        %v450 = vadd.f32 %v177, %v181
        %v451 = vadd.f32 %v450, %v185
        %v452 = vadd.f32 %v451, %v189
        %v453 = vadd.f32 %v452, %v193
        %v454 = vadd.f32 %v453, %v197
        %v455 = vsel %vm376, %v201, 0.0
        %v456 = vadd.f32 %v454, %v455
        %v457 = vrot.slane %v456, 4
        %v458 = vadd.f32 %v456, %v457
        %v459 = vrot.slane %v458, 2
        %v460 = vadd.f32 %v458, %v459
        %v461 = vrot.slane %v460, 1
        %v462 = vadd.f32 %v460, %v461
        %v463 = vadd.f32 %v178, %v182
        %v464 = vadd.f32 %v463, %v186
        %v465 = vadd.f32 %v464, %v190
        %v466 = vadd.f32 %v465, %v194
        %v467 = vadd.f32 %v466, %v198
        %v468 = vsel %vm376, %v202, 0.0
        %v469 = vadd.f32 %v467, %v468
        %v470 = vrot.slane %v469, 4
        %v471 = vadd.f32 %v469, %v470
        %v472 = vrot.slane %v471, 2
        %v473 = vadd.f32 %v471, %v472
        %v474 = vrot.slane %v473, 1
        %v475 = vadd.f32 %v473, %v474
        %v476 = vadd.f32 %v203, %v207
        %v477 = vadd.f32 %v476, %v211
        %v478 = vadd.f32 %v477, %v215
        %v479 = vadd.f32 %v478, %v219
        %v480 = vadd.f32 %v479, %v223
        %v481 = vsel %vm376, %v227, 0.0
        %v482 = vadd.f32 %v480, %v481
        %v483 = vrot.slane %v482, 4
        %v484 = vadd.f32 %v482, %v483
        %v485 = vrot.slane %v484, 2
        %v486 = vadd.f32 %v484, %v485
        %v487 = vrot.slane %v486, 1
        %v488 = vadd.f32 %v486, %v487
        %v489 = vadd.f32 %v204, %v208
        %v490 = vadd.f32 %v489, %v212
        %v491 = vadd.f32 %v490, %v216
        %v492 = vadd.f32 %v491, %v220
        %v493 = vadd.f32 %v492, %v224
        %v494 = vsel %vm376, %v228, 0.0
        %v495 = vadd.f32 %v493, %v494
        %v496 = vrot.slane %v495, 4
        %v497 = vadd.f32 %v495, %v496
        %v498 = vrot.slane %v497, 2
        %v499 = vadd.f32 %v497, %v498
        %v500 = vrot.slane %v499, 1
        %v501 = vadd.f32 %v499, %v500
        %v502 = vadd.f32 %v205, %v209
        %v503 = vadd.f32 %v502, %v213
        %v504 = vadd.f32 %v503, %v217
        %v505 = vadd.f32 %v504, %v221
        %v506 = vadd.f32 %v505, %v225
        %v507 = vsel %vm376, %v229, 0.0
        %v508 = vadd.f32 %v506, %v507
        %v509 = vrot.slane %v508, 4
        %v510 = vadd.f32 %v508, %v509
        %v511 = vrot.slane %v510, 2
        %v512 = vadd.f32 %v510, %v511
        %v513 = vrot.slane %v512, 1
        %v514 = vadd.f32 %v512, %v513
        %v515 = vadd.f32 %v206, %v210
        %v516 = vadd.f32 %v515, %v214
        %v517 = vadd.f32 %v516, %v218
        %v518 = vadd.f32 %v517, %v222
        %v519 = vadd.f32 %v518, %v226
        %v520 = vsel %vm376, %v230, 0.0
        %v521 = vadd.f32 %v519, %v520
        %v522 = vrot.slane %v521, 4
        %v523 = vadd.f32 %v521, %v522
        %v524 = vrot.slane %v523, 2
        %v525 = vadd.f32 %v523, %v524
        %v526 = vrot.slane %v525, 1
        %v527 = vadd.f32 %v525, %v526
        %v528 = vadd.f32 %v231, %v235
        %v529 = vadd.f32 %v528, %v239
        %v530 = vadd.f32 %v529, %v243
        %v531 = vadd.f32 %v530, %v247
        %v532 = vadd.f32 %v531, %v251
        %v533 = vsel %vm376, %v255, 0.0
        %v534 = vadd.f32 %v532, %v533
        %v535 = vrot.slane %v534, 4
        %v536 = vadd.f32 %v534, %v535
        %v537 = vrot.slane %v536, 2
        %v538 = vadd.f32 %v536, %v537
        %v539 = vrot.slane %v538, 1
        %v540 = vadd.f32 %v538, %v539
        %v541 = vadd.f32 %v232, %v236
        %v542 = vadd.f32 %v541, %v240
        %v543 = vadd.f32 %v542, %v244
        %v544 = vadd.f32 %v543, %v248
        %v545 = vadd.f32 %v544, %v252
        %v546 = vsel %vm376, %v256, 0.0
        %v547 = vadd.f32 %v545, %v546
        %v548 = vrot.slane %v547, 4
        %v549 = vadd.f32 %v547, %v548
        %v550 = vrot.slane %v549, 2
        %v551 = vadd.f32 %v549, %v550
        %v552 = vrot.slane %v551, 1
        %v553 = vadd.f32 %v551, %v552
        %v554 = vadd.f32 %v233, %v237
        %v555 = vadd.f32 %v554, %v241
        %v556 = vadd.f32 %v555, %v245
        %v557 = vadd.f32 %v556, %v249
        %v558 = vadd.f32 %v557, %v253
        %v559 = vsel %vm376, %v257, 0.0
        %v560 = vadd.f32 %v558, %v559
        %v561 = vrot.slane %v560, 4
        %v562 = vadd.f32 %v560, %v561
        %v563 = vrot.slane %v562, 2
        %v564 = vadd.f32 %v562, %v563
        %v565 = vrot.slane %v564, 1
        %v566 = vadd.f32 %v564, %v565
        %v567 = vadd.f32 %v234, %v238
        %v568 = vadd.f32 %v567, %v242
        %v569 = vadd.f32 %v568, %v246
        %v570 = vadd.f32 %v569, %v250
        %v571 = vadd.f32 %v570, %v254
        %v572 = vsel %vm376, %v258, 0.0
        %v573 = vadd.f32 %v571, %v572
        %v574 = vrot.slane %v573, 4
        %v575 = vadd.f32 %v573, %v574
        %v576 = vrot.slane %v575, 2
        %v577 = vadd.f32 %v575, %v576
        %v578 = vrot.slane %v577, 1
        %v579 = vadd.f32 %v577, %v578
        %v580 = vadd.f32 %v259, %v263
        %v581 = vadd.f32 %v580, %v267
        %v582 = vadd.f32 %v581, %v271
        %v583 = vadd.f32 %v582, %v275
        %v584 = vadd.f32 %v583, %v279
        %v585 = vsel %vm376, %v283, 0.0
        %v586 = vadd.f32 %v584, %v585
        %v587 = vrot.slane %v586, 4
        %v588 = vadd.f32 %v586, %v587
        %v589 = vrot.slane %v588, 2
        %v590 = vadd.f32 %v588, %v589
        %v591 = vrot.slane %v590, 1
        %v592 = vadd.f32 %v590, %v591
        %v593 = vadd.f32 %v260, %v264
        %v594 = vadd.f32 %v593, %v268
        %v595 = vadd.f32 %v594, %v272
        %v596 = vadd.f32 %v595, %v276
        %v597 = vadd.f32 %v596, %v280
        %v598 = vsel %vm376, %v284, 0.0
        %v599 = vadd.f32 %v597, %v598
        %v600 = vrot.slane %v599, 4
        %v601 = vadd.f32 %v599, %v600
        %v602 = vrot.slane %v601, 2
        %v603 = vadd.f32 %v601, %v602
        %v604 = vrot.slane %v603, 1
        %v605 = vadd.f32 %v603, %v604
        %v606 = vadd.f32 %v261, %v265
        %v607 = vadd.f32 %v606, %v269
        %v608 = vadd.f32 %v607, %v273
        %v609 = vadd.f32 %v608, %v277
        %v610 = vadd.f32 %v609, %v281
        %v611 = vsel %vm376, %v285, 0.0
        %v612 = vadd.f32 %v610, %v611
        %v613 = vrot.slane %v612, 4
        %v614 = vadd.f32 %v612, %v613
        %v615 = vrot.slane %v614, 2
        %v616 = vadd.f32 %v614, %v615
        %v617 = vrot.slane %v616, 1
        %v618 = vadd.f32 %v616, %v617
        %v619 = vadd.f32 %v262, %v266
        %v620 = vadd.f32 %v619, %v270
        %v621 = vadd.f32 %v620, %v274
        %v622 = vadd.f32 %v621, %v278
        %v623 = vadd.f32 %v622, %v282
        %v624 = vsel %vm376, %v286, 0.0
        %v625 = vadd.f32 %v623, %v624
        %v626 = vrot.slane %v625, 4
        %v627 = vadd.f32 %v625, %v626
        %v628 = vrot.slane %v627, 2
        %v629 = vadd.f32 %v627, %v628
        %v630 = vrot.slane %v629, 1
        %v631 = vadd.f32 %v629, %v630
        %v632 = vadd.f32 %v287, %v291
        %v633 = vadd.f32 %v632, %v295
        %v634 = vadd.f32 %v633, %v299
        %v635 = vadd.f32 %v634, %v303
        %v636 = vadd.f32 %v635, %v307
        %v637 = vsel %vm376, %v311, 0.0
        %v638 = vadd.f32 %v636, %v637
        %v639 = vrot.slane %v638, 4
        %v640 = vadd.f32 %v638, %v639
        %v641 = vrot.slane %v640, 2
        %v642 = vadd.f32 %v640, %v641
        %v643 = vrot.slane %v642, 1
        %v644 = vadd.f32 %v642, %v643
        %v645 = vadd.f32 %v288, %v292
        %v646 = vadd.f32 %v645, %v296
        %v647 = vadd.f32 %v646, %v300
        %v648 = vadd.f32 %v647, %v304
        %v649 = vadd.f32 %v648, %v308
        %v650 = vsel %vm376, %v312, 0.0
        %v651 = vadd.f32 %v649, %v650
        %v652 = vrot.slane %v651, 4
        %v653 = vadd.f32 %v651, %v652
        %v654 = vrot.slane %v653, 2
        %v655 = vadd.f32 %v653, %v654
        %v656 = vrot.slane %v655, 1
        %v657 = vadd.f32 %v655, %v656
        %v658 = vadd.f32 %v289, %v293
        %v659 = vadd.f32 %v658, %v297
        %v660 = vadd.f32 %v659, %v301
        %v661 = vadd.f32 %v660, %v305
        %v662 = vadd.f32 %v661, %v309
        %v663 = vsel %vm376, %v313, 0.0
        %v664 = vadd.f32 %v662, %v663
        %v665 = vrot.slane %v664, 4
        %v666 = vadd.f32 %v664, %v665
        %v667 = vrot.slane %v666, 2
        %v668 = vadd.f32 %v666, %v667
        %v669 = vrot.slane %v668, 1
        %v670 = vadd.f32 %v668, %v669
        %v671 = vadd.f32 %v290, %v294
        %v672 = vadd.f32 %v671, %v298
        %v673 = vadd.f32 %v672, %v302
        %v674 = vadd.f32 %v673, %v306
        %v675 = vadd.f32 %v674, %v310
        %v676 = vsel %vm376, %v314, 0.0
        %v677 = vadd.f32 %v675, %v676
        %v678 = vrot.slane %v677, 4
        %v679 = vadd.f32 %v677, %v678
        %v680 = vrot.slane %v679, 2
        %v681 = vadd.f32 %v679, %v680
        %v682 = vrot.slane %v681, 1
        %v683 = vadd.f32 %v681, %v682
        %v684 = vadd.f32 %v315, %v319
        %v685 = vadd.f32 %v684, %v323
        %v686 = vadd.f32 %v685, %v327
        %v687 = vadd.f32 %v686, %v331
        %v688 = vadd.f32 %v687, %v335
        %v689 = vsel %vm376, %v339, 0.0
        %v690 = vadd.f32 %v688, %v689
        %v691 = vrot.slane %v690, 4
        %v692 = vadd.f32 %v690, %v691
        %v693 = vrot.slane %v692, 2
        %v694 = vadd.f32 %v692, %v693
        %v695 = vrot.slane %v694, 1
        %v696 = vadd.f32 %v694, %v695
        %v697 = vadd.f32 %v316, %v320
        %v698 = vadd.f32 %v697, %v324
        %v699 = vadd.f32 %v698, %v328
        %v700 = vadd.f32 %v699, %v332
        %v701 = vadd.f32 %v700, %v336
        %v702 = vsel %vm376, %v340, 0.0
        %v703 = vadd.f32 %v701, %v702
        %v704 = vrot.slane %v703, 4
        %v705 = vadd.f32 %v703, %v704
        %v706 = vrot.slane %v705, 2
        %v707 = vadd.f32 %v705, %v706
        %v708 = vrot.slane %v707, 1
        %v709 = vadd.f32 %v707, %v708
        %v710 = vadd.f32 %v317, %v321
        %v711 = vadd.f32 %v710, %v325
        %v712 = vadd.f32 %v711, %v329
        %v713 = vadd.f32 %v712, %v333
        %v714 = vadd.f32 %v713, %v337
        %v715 = vsel %vm376, %v341, 0.0
        %v716 = vadd.f32 %v714, %v715
        %v717 = vrot.slane %v716, 4
        %v718 = vadd.f32 %v716, %v717
        %v719 = vrot.slane %v718, 2
        %v720 = vadd.f32 %v718, %v719
        %v721 = vrot.slane %v720, 1
        %v722 = vadd.f32 %v720, %v721
        %v723 = vadd.f32 %v318, %v322
        %v724 = vadd.f32 %v723, %v326
        %v725 = vadd.f32 %v724, %v330
        %v726 = vadd.f32 %v725, %v334
        %v727 = vadd.f32 %v726, %v338
        %v728 = vsel %vm376, %v342, 0.0
        %v729 = vadd.f32 %v727, %v728
        %v730 = vrot.slane %v729, 4
        %v731 = vadd.f32 %v729, %v730
        %v732 = vrot.slane %v731, 2
        %v733 = vadd.f32 %v731, %v732
        %v734 = vrot.slane %v733, 1
        %v735 = vadd.f32 %v733, %v734
        %v736 = vadd.f32 %v343, %v347
        %v737 = vadd.f32 %v736, %v351
        %v738 = vadd.f32 %v737, %v355
        %v739 = vadd.f32 %v738, %v359
        %v740 = vadd.f32 %v739, %v363
        %v741 = vsel %vm376, %v367, 0.0
        %v742 = vadd.f32 %v740, %v741
        %v743 = vrot.slane %v742, 4
        %v744 = vadd.f32 %v742, %v743
        %v745 = vrot.slane %v744, 2
        %v746 = vadd.f32 %v744, %v745
        %v747 = vrot.slane %v746, 1
        %v748 = vadd.f32 %v746, %v747
        %v749 = vadd.f32 %v344, %v348
        %v750 = vadd.f32 %v749, %v352
        %v751 = vadd.f32 %v750, %v356
        %v752 = vadd.f32 %v751, %v360
        %v753 = vadd.f32 %v752, %v364
        %v754 = vsel %vm376, %v368, 0.0
        %v755 = vadd.f32 %v753, %v754
        %v756 = vrot.slane %v755, 4
        %v757 = vadd.f32 %v755, %v756
        %v758 = vrot.slane %v757, 2
        %v759 = vadd.f32 %v757, %v758
        %v760 = vrot.slane %v759, 1
        %v761 = vadd.f32 %v759, %v760
        %v762 = vadd.f32 %v345, %v349
        %v763 = vadd.f32 %v762, %v353
        %v764 = vadd.f32 %v763, %v357
        %v765 = vadd.f32 %v764, %v361
        %v766 = vadd.f32 %v765, %v365
        %v767 = vsel %vm376, %v369, 0.0
        %v768 = vadd.f32 %v766, %v767
        %v769 = vrot.slane %v768, 4
        %v770 = vadd.f32 %v768, %v769
        %v771 = vrot.slane %v770, 2
        %v772 = vadd.f32 %v770, %v771
        %v773 = vrot.slane %v772, 1
        %v774 = vadd.f32 %v772, %v773
        %v775 = vadd.f32 %v346, %v350
        %v776 = vadd.f32 %v775, %v354
        %v777 = vadd.f32 %v776, %v358
        %v778 = vadd.f32 %v777, %v362
        %v779 = vadd.f32 %v778, %v366
        %v780 = vsel %vm376, %v370, 0.0
        %v781 = vadd.f32 %v779, %v780
        %v782 = vrot.slane %v781, 4
        %v783 = vadd.f32 %v781, %v782
        %v784 = vrot.slane %v783, 2
        %v785 = vadd.f32 %v783, %v784
        %v786 = vrot.slane %v785, 1
        %v787 = vadd.f32 %v785, %v786
        %v788 = vld [vmem:[%s1] sm:$0xff]
        %v789 = vld [vmem:[%s1 + $0x8] sm:$0xff]
        %v790 = vld [vmem:[%s1 + $0x10] sm:$0xff]
        %v791 = vld [vmem:[%s1 + $0x18] sm:$0xff]
        %v792 = vld [vmem:[%s1 + $0x20] sm:$0xff]
        %v793 = vld [vmem:[%s1 + $0x28] sm:$0xff]
        %v794 = vld [vmem:[%s1 + $0x30] sm:$0xff]
        %v795 = vld [vmem:[%s1 + $0x38] sm:$0xff]
        %v796 = vld [vmem:[%s1 + $0x40] sm:$0xff]
        %v797 = vld [vmem:[%s1 + $0x48] sm:$0xff]
        %v798 = vld [vmem:[%s1 + $0x50] sm:$0xff]
        %v799 = vld [vmem:[%s1 + $0x58] sm:$0xff]
        %v800 = vld [vmem:[%s1 + $0x60] sm:$0xff]
        %v801 = vld [vmem:[%s1 + $0x68] sm:$0xff]
        %v802 = vld [vmem:[%s1 + $0x70] sm:$0xff]
        %v803 = vld [vmem:[%s1 + $0x78] sm:$0xff]
        %v804 = vld [vmem:[%s1 + $0x80] sm:$0xff]
        %v805 = vld [vmem:[%s1 + $0x88] sm:$0xff]
        %v806 = vld [vmem:[%s1 + $0x90] sm:$0xff]
        %v807 = vld [vmem:[%s1 + $0x98] sm:$0xff]
        %v808 = vld [vmem:[%s1 + $0xa0] sm:$0xff]
        %v809 = vld [vmem:[%s1 + $0xa8] sm:$0xff]
        %v810 = vld [vmem:[%s1 + $0xb0] sm:$0xff]
        %v811 = vld [vmem:[%s1 + $0xb8] sm:$0xff]
        %v812 = vld [vmem:[%s1 + $0xc0] sm:$0xff]
        %v813 = vld [vmem:[%s1 + $0xc8] sm:$0xff]
        %v814 = vld [vmem:[%s1 + $0xd0] sm:$0xff]
        %v815 = vld [vmem:[%s1 + $0xd8] sm:$0xff]
        %v816 = vld [vmem:[%s1 + $0xe0] sm:$0xff]
        %v817 = vld [vmem:[%s1 + $0xe8] sm:$0xff]
        %v818 = vld [vmem:[%s1 + $0xf0] sm:$0xff]
        %v819 = vld [vmem:[%s1 + $0xf8] sm:$0xff]
        %v820 = vld [vmem:[%s1 + $0x100] sm:$0xff]
        %v821 = vld [vmem:[%s1 + $0x108] sm:$0xff]
        %v822 = vld [vmem:[%s1 + $0x110] sm:$0xff]
        %v823 = vld [vmem:[%s1 + $0x118] sm:$0xff]
        %v824 = vld [vmem:[%s1 + $0x120] sm:$0xff]
        %v825 = vld [vmem:[%s1 + $0x128] sm:$0xff]
        %v826 = vld [vmem:[%s1 + $0x130] sm:$0xff]
        %v827 = vld [vmem:[%s1 + $0x138] sm:$0xff]
        %v828 = vld [vmem:[%s1 + $0x140] sm:$0xff]
        %v829 = vld [vmem:[%s1 + $0x148] sm:$0xff]
        %v830 = vld [vmem:[%s1 + $0x150] sm:$0xff]
        %v831 = vld [vmem:[%s1 + $0x158] sm:$0xff]
        %v832 = vld [vmem:[%s1 + $0x160] sm:$0xff]
        %v833 = vld [vmem:[%s1 + $0x168] sm:$0xff]
        %v834 = vld [vmem:[%s1 + $0x170] sm:$0xff]
        %v835 = vld [vmem:[%s1 + $0x178] sm:$0xff]
        %v836 = vld [vmem:[%s1 + $0x180] sm:$0xff]
        %v837 = vld [vmem:[%s1 + $0x188] sm:$0xff]
        %v838 = vld [vmem:[%s1 + $0x190] sm:$0xff]
        %v839 = vld [vmem:[%s1 + $0x198] sm:$0xff]
        %v840 = vld [vmem:[%s1 + $0x1a0] sm:$0xff]
        %v841 = vld [vmem:[%s1 + $0x1a8] sm:$0xff]
        %v842 = vld [vmem:[%s1 + $0x1b0] sm:$0xff]
        %v843 = vld [vmem:[%s1 + $0x1b8] sm:$0xff]
        %v844 = vld [vmem:[%s1 + $0x1c0] sm:$0xff]
        %v845 = vld [vmem:[%s1 + $0x1c8] sm:$0xff]
        %v846 = vld [vmem:[%s1 + $0x1d0] sm:$0xff]
        %v847 = vld [vmem:[%s1 + $0x1d8] sm:$0xff]
        %v848 = vld [vmem:[%s1 + $0x1e0] sm:$0xff]
        %v849 = vld [vmem:[%s1 + $0x1e8] sm:$0xff]
        %v850 = vld [vmem:[%s1 + $0x1f0] sm:$0xff]
        %v851 = vld [vmem:[%s1 + $0x1f8] sm:$0xff]
        %v852 = vld [vmem:[%s1 + $0x200] sm:$0x1]
        %v853 = vlaneseq
        %v854 = vshrl.u32 %v853, 7
        %v855 = vsub.s32 0, %v854
        %v856 = vrot.slane %v852, %v855
        %vm889 = vcmask 1041409
        %v890 = vsel %vm889, %v436, %v384
        %vm891 = vcmask 1042434
        %v892 = vsel %vm891, %v488, %v890
        %vm893 = vcmask 1043459
        %v894 = vsel %vm893, %v540, %v892
        %vm895 = vcmask 1044484
        %v896 = vsel %vm895, %v592, %v894
        %vm897 = vcmask 1045509
        %v898 = vsel %vm897, %v644, %v896
        %vm899 = vcmask 1046534
        %v900 = vsel %vm899, %v696, %v898
        %vm901 = vcmask 1047559
        %v902 = vsel %vm901, %v748, %v900
        %v903 = vsel %vm889, %v449, %v397
        %v904 = vsel %vm891, %v501, %v903
        %v905 = vsel %vm893, %v553, %v904
        %v906 = vsel %vm895, %v605, %v905
        %v907 = vsel %vm897, %v657, %v906
        %v908 = vsel %vm899, %v709, %v907
        %v909 = vsel %vm901, %v761, %v908
        %v910 = vsel %vm889, %v462, %v410
        %v911 = vsel %vm891, %v514, %v910
        %v912 = vsel %vm893, %v566, %v911
        %v913 = vsel %vm895, %v618, %v912
        %v914 = vsel %vm897, %v670, %v913
        %v915 = vsel %vm899, %v722, %v914
        %v916 = vsel %vm901, %v774, %v915
        %v917 = vsel %vm889, %v475, %v423
        %v918 = vsel %vm891, %v527, %v917
        %v919 = vsel %vm893, %v579, %v918
        %v920 = vsel %vm895, %v631, %v919
        %v921 = vsel %vm897, %v683, %v920
        %v922 = vsel %vm899, %v735, %v921
        %v923 = vsel %vm901, %v787, %v922
        %928 = vmatprep.subr.mxu0 0.0
        %929 = vmatpush1.msra.mxu0 %v788
        %930 = vmatprep.subr.mxu0 0.0
        %931 = vmatpush1.msra.mxu0 %v789
        %932 = vmatprep.subr.mxu0 0.0
        %933 = vmatpush1.msra.mxu0 %v790
        %934 = vmatprep.subr.mxu0 0.0
        %935 = vmatpush1.msra.mxu0 %v791
        %936 = vmatprep.subr.mxu0 0.0
        %937 = vmatpush1.msra.mxu0 %v792
        %938 = vmatprep.subr.mxu0 0.0
        %939 = vmatpush1.msra.mxu0 %v793
        %940 = vmatprep.subr.mxu0 0.0
        %941 = vmatpush1.msra.mxu0 %v794
        %942 = vmatprep.subr.mxu0 0.0
        %943 = vmatpush1.msra.mxu0 %v795
        %944 = vmatprep.subr.mxu0 0.0
        %945 = vmatpush1.msra.mxu0 %v796
        %946 = vmatprep.subr.mxu0 0.0
        %947 = vmatpush1.msra.mxu0 %v797
        %948 = vmatprep.subr.mxu0 0.0
        %949 = vmatpush1.msra.mxu0 %v798
        %950 = vmatprep.subr.mxu0 0.0
        %951 = vmatpush1.msra.mxu0 %v799
        %952 = vmatprep.subr.mxu0 0.0
        %953 = vmatpush1.msra.mxu0 %v800
        %954 = vmatprep.subr.mxu0 0.0
        %955 = vmatpush1.msra.mxu0 %v801
        %956 = vmatprep.subr.mxu0 0.0
        %957 = vmatpush1.msra.mxu0 %v802
        %958 = vmatprep.subr.mxu0 0.0
        %959 = vmatpush1.msra.mxu0 %v803
        %960 = vmatprep.subr.mxu0 0.0
        %961 = vmatpush1.msra.mxu0 %v804
        %962 = vmatprep.subr.mxu0 0.0
        %963 = vmatpush1.msra.mxu0 %v805
        %964 = vmatprep.subr.mxu0 0.0
        %965 = vmatpush1.msra.mxu0 %v806
        %966 = vmatprep.subr.mxu0 0.0
        %967 = vmatpush1.msra.mxu0 %v807
        %968 = vmatprep.subr.mxu0 0.0
        %969 = vmatpush1.msra.mxu0 %v808
        %970 = vmatprep.subr.mxu0 0.0
        %971 = vmatpush1.msra.mxu0 %v809
        %972 = vmatprep.subr.mxu0 0.0
        %973 = vmatpush1.msra.mxu0 %v810
        %974 = vmatprep.subr.mxu0 0.0
        %975 = vmatpush1.msra.mxu0 %v811
        %976 = vmatprep.subr.mxu0 0.0
        %977 = vmatpush1.msra.mxu0 %v812
        %978 = vmatprep.subr.mxu0 0.0
        %979 = vmatpush1.msra.mxu0 %v813
        %980 = vmatprep.subr.mxu0 0.0
        %981 = vmatpush1.msra.mxu0 %v814
        %982 = vmatprep.subr.mxu0 0.0
        %983 = vmatpush1.msra.mxu0 %v815
        %984 = vmatprep.subr.mxu0 0.0
        %985 = vmatpush1.msra.mxu0 %v816
        %986 = vmatprep.subr.mxu0 0.0
        %987 = vmatpush1.msra.mxu0 %v817
        %988 = vmatprep.subr.mxu0 0.0
        %989 = vmatpush1.msra.mxu0 %v818
        %990 = vmatprep.subr.mxu0 0.0
        %991 = vmatpush1.msra.mxu0 %v819
        %992 = vmatprep.mubr.f32.mxu0 %v909
        %993 = vmatmul.mubr.f32.gmra.mrb[0].mxu0 %v902
        %v994 = vpop.f32.mrb[0].mxu0
        %v995 = vadd.f32 %v856, %v994
        %v996 = vpop.f32.mrb[0].mxu0
        %997 = vdwg.mxu0
        %998 = vmatprep.subr.mxu0 0.0
        %999 = vmatpush1.msra.mxu0 %v820
        %1000 = vmatprep.subr.mxu0 0.0
        %1001 = vmatpush1.msra.mxu0 %v821
        %1002 = vmatprep.subr.mxu0 0.0
        %1003 = vmatpush1.msra.mxu0 %v822
        %1004 = vmatprep.subr.mxu0 0.0
        %1005 = vmatpush1.msra.mxu0 %v823
        %1006 = vmatprep.subr.mxu0 0.0
        %1007 = vmatpush1.msra.mxu0 %v824
        %1008 = vmatprep.subr.mxu0 0.0
        %1009 = vmatpush1.msra.mxu0 %v825
        %1010 = vmatprep.subr.mxu0 0.0
        %1011 = vmatpush1.msra.mxu0 %v826
        %1012 = vmatprep.subr.mxu0 0.0
        %1013 = vmatpush1.msra.mxu0 %v827
        %1014 = vmatprep.subr.mxu0 0.0
        %1015 = vmatpush1.msra.mxu0 %v828
        %1016 = vmatprep.subr.mxu0 0.0
        %1017 = vmatpush1.msra.mxu0 %v829
        %1018 = vmatprep.subr.mxu0 0.0
        %1019 = vmatpush1.msra.mxu0 %v830
        %1020 = vmatprep.subr.mxu0 0.0
        %1021 = vmatpush1.msra.mxu0 %v831
        %1022 = vmatprep.subr.mxu0 0.0
        %1023 = vmatpush1.msra.mxu0 %v832
        %1024 = vmatprep.subr.mxu0 0.0
        %1025 = vmatpush1.msra.mxu0 %v833
        %1026 = vmatprep.subr.mxu0 0.0
        %1027 = vmatpush1.msra.mxu0 %v834
        %1028 = vmatprep.subr.mxu0 0.0
        %1029 = vmatpush1.msra.mxu0 %v835
        %1030 = vmatprep.subr.mxu0 0.0
        %1031 = vmatpush1.msra.mxu0 %v836
        %1032 = vmatprep.subr.mxu0 0.0
        %1033 = vmatpush1.msra.mxu0 %v837
        %1034 = vmatprep.subr.mxu0 0.0
        %1035 = vmatpush1.msra.mxu0 %v838
        %1036 = vmatprep.subr.mxu0 0.0
        %1037 = vmatpush1.msra.mxu0 %v839
        %1038 = vmatprep.subr.mxu0 0.0
        %1039 = vmatpush1.msra.mxu0 %v840
        %1040 = vmatprep.subr.mxu0 0.0
        %1041 = vmatpush1.msra.mxu0 %v841
        %1042 = vmatprep.subr.mxu0 0.0
        %1043 = vmatpush1.msra.mxu0 %v842
        %1044 = vmatprep.subr.mxu0 0.0
        %1045 = vmatpush1.msra.mxu0 %v843
        %1046 = vmatprep.subr.mxu0 0.0
        %1047 = vmatpush1.msra.mxu0 %v844
        %1048 = vmatprep.subr.mxu0 0.0
        %1049 = vmatpush1.msra.mxu0 %v845
        %1050 = vmatprep.subr.mxu0 0.0
        %1051 = vmatpush1.msra.mxu0 %v846
        %1052 = vmatprep.subr.mxu0 0.0
        %1053 = vmatpush1.msra.mxu0 %v847
        %1054 = vmatprep.subr.mxu0 0.0
        %1055 = vmatpush1.msra.mxu0 %v848
        %1056 = vmatprep.subr.mxu0 0.0
        %1057 = vmatpush1.msra.mxu0 %v849
        %1058 = vmatprep.subr.mxu0 0.0
        %1059 = vmatpush1.msra.mxu0 %v850
        %1060 = vmatprep.subr.mxu0 0.0
        %1061 = vmatpush1.msra.mxu0 %v851
        %1062 = vmatprep.mubr.f32.mxu0 %v923
        %1063 = vmatmul.mubr.f32.gmra.mrb[0].mxu0 %v916
        %v1064 = vpop.f32.mrb[0].mxu0
        %v1065 = vadd.f32 %v995, %v1064
        %v1066 = vpop.f32.mrb[0].mxu0
        %1067 = vdwg.mxu0
        %1068 = vst [vmem:[%s139] sm:$0xff] %v1065
        %s1069 = sand.u32 %s71, 1
        %s1070 = scalar_lea.sflag [#allocation3], %s1069
        %s1071 = sand.u32 %s71, 1
        %s1072 = smul.addr %s1071, 8
        %s1073 = scalar_lea.vmem [#allocation2], %s1072
        // Predicated region
        $region29: #{tpu_custom_call.1} parent=27 // pred_check
          %p1074 = pneg %p81
        $region30: #{tpu_custom_call.1} parent=27 // pred_check_branch
          %1076 = sbr.rel (%p1074) target = $region32
        $region31: #{tpu_custom_call.1} parent=27 // pred_region
          %s1078 = ssub.s32 128, 128
          %1079 = vsyncadd %s1070, %s1078
          %s1080 = smul.addr %s16, 128
          %s1081 = scalar_lea.hbm %s2, %s1080
          %s1083 = sshll.u32 %s1073, 4
          %s1084 = int_to_ptr.vmem [resolvable:$true] %s1083
          %1086 = dma.vmem_to_hbm [thread:$0]  %s1084, 128, %s1081, %s1070
        $region32: #{tpu_custom_call.1} parent=27 // pred_fallthru
          _
      $region28: #{tpu_custom_call.1} parent=5 // pred_fallthru
        _
      %p1087 = scmp.le.s32.totalorder 2, %s11
      // Predicated region
      $region33: #{tpu_custom_call.1} parent=5 // pred_check
        %p1088 = pneg %p1087
      $region34: #{tpu_custom_call.1} parent=5 // pred_check_branch
        %1090 = sbr.rel (%p1088) target = $region36
      $region35: #{tpu_custom_call.1} parent=5 // pred_region
        %s1091 = ssub.s32 %s11, 2
        // Predicated region
        $region37: #{tpu_custom_call.1} parent=35 // pred_check
          %p1092 = pneg %p87
        $region38: #{tpu_custom_call.1} parent=35 // pred_check_branch
          %1094 = sbr.rel (%p1092) target = $region40
        $region39: #{tpu_custom_call.1} parent=35 // pred_region
          %s1095 = sand.u32 %s72, 1
          %s1096 = scalar_lea.sflag [#allocation3], %s1095
          %s1097 = sand.u32 %s72, 1
          %s1098 = smul.addr %s1097, 8
          %s1099 = scalar_lea.vmem [#allocation2], %s1098
          %1100 = dma.done %s1096, 128
        $region40: #{tpu_custom_call.1} parent=35 // pred_fallthru
          _
      $region36: #{tpu_custom_call.1} parent=5 // pred_fallthru
        _
    $region6: #{tpu_custom_call.1} parent=1 // loop_footer
      %s15 = sadd.s32 1, %s11
    $region7: #{tpu_custom_call.1} parent=1 // loop_footer_branch
      %10 = sbr.rel target = $region3
    $region8: #{tpu_custom_call.1} parent=1 // loop_exit
      _
    %1101 = vsyncpa [#allocation3], 1
    %s1102 = scalar_lea.sflag [#allocation3], 1
    %1103 = vsyncpa %s1102, 1

</llo_original>
